<compile_context>
chip_gen: v7x
topology: tpu7x:2x2x1
jax: 0.10.0
libtpu: 0.0.40
codegen_flags: <defaults>
</compile_context>

<pallas_src>
import functools

import jax
import jax.numpy as jnp
from jax import lax
from jax.experimental import pallas as pl
from jax.experimental.pallas import tpu as pltpu

_LANES = 128
_MAX_BLOCK_ROWS = 1024   # (1024, 128) f32 block = 512 KiB / operand / buffer


# ---------------------------------------------------------------------------
# Kernels
# ---------------------------------------------------------------------------
def _mse_sum_kernel(*refs, block_rows, valid_rows, weighted):
    """Accumulate sum((pred - target)^2 [* weight]) over the grid.

    Grid is (n_shards, steps): axis 0 is "parallel" (v7x megacore sharding),
    axis 1 is the "arbitrary" reduction axis. Each shard accumulates per-lane
    partial sums into a (1, 128) VMEM accumulator; the shard's accumulator
    row is written out in the epilogue and the tiny cross-lane/cross-shard
    reduction is done in plain JAX.
    """
    if weighted:
        pred_ref, tgt_ref, w_ref, out_ref, acc_ref = refs
    else:
        pred_ref, tgt_ref, out_ref, acc_ref = refs
        w_ref = None

    @pl.when(pl.program_id(1) == 0)
    def _():
        acc_ref[...] = jnp.zeros_like(acc_ref)

    d = pred_ref[...].astype(jnp.float32) - tgt_ref[...].astype(jnp.float32)
    sq = d * d
    if weighted:
        sq = sq * w_ref[...].astype(jnp.float32)

    if valid_rows is not None:
        # The globally-last block is partial: rows read past the end of the
        # slab hold unspecified data -> mask them out of the sum.
        base = (pl.program_id(0) * pl.num_programs(1)
                + pl.program_id(1)) * block_rows
        row = lax.broadcasted_iota(jnp.int32, sq.shape, 0) + base
        sq = jnp.where(row < valid_rows, sq, 0.0)

    # Per-lane partials: VPU adds across vregs + one cheap sublane reduce.
    acc_ref[...] += jnp.sum(sq, axis=0, keepdims=True)

    @pl.when(pl.program_id(1) == pl.num_programs(1) - 1)
    def _():
        out_ref[...] = acc_ref[...]


def _mse_none_kernel(pred_ref, tgt_ref, out_ref):
    d = pred_ref[...].astype(jnp.float32) - tgt_ref[...].astype(jnp.float32)
    out_ref[...] = (d * d).astype(out_ref.dtype)


def _mse_none_weighted_kernel(pred_ref, tgt_ref, w_ref, out_ref):
    d = pred_ref[...].astype(jnp.float32) - tgt_ref[...].astype(jnp.float32)
    out_ref[...] = (d * d * w_ref[...].astype(jnp.float32)).astype(out_ref.dtype)


# ---------------------------------------------------------------------------
# Wrappers
# ---------------------------------------------------------------------------
def _to_slab(x):
    """Flatten to a lane-dense (rows, 128) slab.

    Common case (numel % 128 == 0): pure reshape, no HBM copy. Only when the
    element count is not a multiple of 128 do we zero-pad the flat tail
    (zeros contribute 0 to the squared-error sum).
    """
    flat = x.reshape(-1)
    n = flat.shape[0]
    rem = n % _LANES
    if rem != 0:
        flat = jnp.pad(flat, (0, _LANES - rem))
    return flat.reshape(-1, _LANES), n


def _mse_reduce_sum(pred, target, weight=None):
    """Return (sum of (pred-target)^2 [* weight], element count)."""
    pred2d, n = _to_slab(pred)
    tgt2d, _ = _to_slab(target)
    operands = [pred2d, tgt2d]
    if weight is not None:
        w2d, _ = _to_slab(weight)
        operands.append(w2d)

    rows = pred2d.shape[0]
    block_rows = min(_MAX_BLOCK_ROWS, rows)
    total_blocks = pl.cdiv(rows, block_rows)
    # Shard the block loop across two "parallel" grid entries when possible so
    # v7x's two TensorCores each stream half of HBM; on single-TC chips this
    # is just two sequential passes (harmless).
    n_shards = 2 if (total_blocks >= 2 and total_blocks % 2 == 0) else 1
    steps = total_blocks // n_shards
    valid_rows = rows if rows % block_rows != 0 else None  # static mask flag

    kernel = functools.partial(_mse_sum_kernel, block_rows=block_rows,
                               valid_rows=valid_rows,
                               weighted=weight is not None)

    in_spec = pl.BlockSpec((block_rows, _LANES),
                           lambda s, k: (s * steps + k, 0))

    # Lane-dense output: one (1, 128) accumulator row per shard.
    partials = pl.pallas_call(
        kernel,
        out_shape=jax.ShapeDtypeStruct((1, n_shards * _LANES), jnp.float32),
        grid=(n_shards, steps),
        in_specs=[in_spec] * len(operands),
        out_specs=pl.BlockSpec((1, _LANES), lambda s, k: (0, s)),
        scratch_shapes=[pltpu.VMEM((1, _LANES), jnp.float32)],
        compiler_params=pltpu.CompilerParams(
            dimension_semantics=("parallel", "arbitrary")),
    )(*operands)
    return jnp.sum(partials), n


def _mse_none(pred, target, weight=None):
    pred2d, n = _to_slab(pred)
    tgt2d, _ = _to_slab(target)
    operands = [pred2d, tgt2d]
    kernel = _mse_none_kernel
    if weight is not None:
        w2d, _ = _to_slab(weight)
        operands.append(w2d)
        kernel = _mse_none_weighted_kernel

    rows = pred2d.shape[0]
    block_rows = min(_MAX_BLOCK_ROWS, rows)
    tile_spec = pl.BlockSpec((block_rows, _LANES), lambda i: (i, 0))

    out2d = pl.pallas_call(
        kernel,
        out_shape=jax.ShapeDtypeStruct((rows, _LANES), pred.dtype),
        grid=(pl.cdiv(rows, block_rows),),        # partial last block is fine
        in_specs=[tile_spec] * len(operands),     # (elementwise, OOB writes dropped)
        out_specs=tile_spec,
        compiler_params=pltpu.CompilerParams(
            dimension_semantics=("parallel",)),
    )(*operands)

    if rows * _LANES == n:                 # common case: free reshape, no copy
        return out2d.reshape(pred.shape)
    # Rare case (numel % 128 != 0): trim the zero-padded tail.
    return out2d.reshape(-1)[:n].reshape(pred.shape)


def mse_loss_pallas(pred, target, weight=None, reduction='mean'):
    """Mirrors basicsr's @weighted_loss mse_loss: (pred-target)^2 (*weight) + reduction."""
    if reduction == 'none':
        return _mse_none(pred, target, weight)
    total, n = _mse_reduce_sum(pred, target, weight)
    if reduction == 'sum':
        return total
    # 'mean': torch-style mean of the (weighted) elementwise loss, i.e.
    # divide by the element count. Some basicsr forks normalize weighted
    # means by weight.sum() instead; element-count division is kept here.
    return total / jnp.float32(n)


class MSELossPallas:
    """JAX/Pallas port of basicsr MSELoss (forward only)."""

    def __init__(self, loss_weight=1.0, reduction='mean'):
        if reduction not in ('none', 'mean', 'sum'):
            raise ValueError(f'Unsupported reduction mode: {reduction}')
        self.loss_weight = loss_weight
        self.reduction = reduction

    def __call__(self, pred, target, weight=None, **kwargs):
        return self.loss_weight * mse_loss_pallas(pred, target, weight,
                                                  reduction=self.reduction)


# ---------------------------------------------------------------------------
# Demo / self-check
# ---------------------------------------------------------------------------
if __name__ == "__main__":
    key = jax.random.PRNGKey(0)
    k1, k2, k3 = jax.random.split(key, 3)

    # --- primary NCHW case (matches the PyTorch module docstring) ----------
    N, C, H, W = 2, 4, 16, 16
    pred = jax.random.normal(k1, (N, C, H, W), dtype=jnp.float32)
    target = jax.random.normal(k2, (N, C, H, W), dtype=jnp.float32)
    weight = jax.random.uniform(k3, (N, C, H, W), dtype=jnp.float32)

    loss_fn = MSELossPallas(loss_weight=1.0, reduction='mean')

    out_mean = jax.block_until_ready(loss_fn(pred, target))
    ref_mean = jnp.mean((pred - target) ** 2)
    assert jnp.allclose(out_mean, ref_mean, rtol=1e-5, atol=1e-5), (out_mean, ref_mean)

    out_wmean = jax.block_until_ready(loss_fn(pred, target, weight))
    ref_wmean = jnp.mean((pred - target) ** 2 * weight)
    assert jnp.allclose(out_wmean, ref_wmean, rtol=1e-5, atol=1e-5)

    out_sum = jax.block_until_ready(MSELossPallas(reduction='sum')(pred, target))
    ref_sum = jnp.sum((pred - target) ** 2)
    assert jnp.allclose(out_sum, ref_sum, rtol=1e-5, atol=1e-3)

    out_none = jax.block_until_ready(MSELossPallas(reduction='none')(pred, target))
    ref_none = (pred - target) ** 2
    assert out_none.shape == (N, C, H, W)
    assert jnp.allclose(out_none, ref_none, rtol=1e-6, atol=1e-6)

    out_wnone = jax.block_until_ready(
        MSELossPallas(reduction='none')(pred, target, weight))
    assert jnp.allclose(out_wnone, ref_none * weight, rtol=1e-6, atol=1e-6)

    # --- multi-block path: 1280 slab rows -> 2 shards, masked partial block -
    kb1, kb2, kb3 = jax.random.split(jax.random.PRNGKey(1), 3)
    big_p = jax.random.normal(kb1, (4, 8, 64, 80), dtype=jnp.float32)
    big_t = jax.random.normal(kb2, (4, 8, 64, 80), dtype=jnp.float32)
    big_w = jax.random.uniform(kb3, (4, 8, 64, 80), dtype=jnp.float32)
    out_big = jax.block_until_ready(loss_fn(big_p, big_t))
    assert jnp.allclose(out_big, jnp.mean((big_p - big_t) ** 2),
                        rtol=1e-5, atol=1e-5)
    out_bigw = jax.block_until_ready(loss_fn(big_p, big_t, big_w))
    assert jnp.allclose(out_bigw, jnp.mean((big_p - big_t) ** 2 * big_w),
                        rtol=1e-5, atol=1e-5)
    out_big_none = jax.block_until_ready(
        MSELossPallas(reduction='none')(big_p, big_t))
    assert jnp.allclose(out_big_none, (big_p - big_t) ** 2, rtol=1e-6, atol=1e-6)

    # --- ragged path: numel not a multiple of 128 (pad fallback) ------------
    ko1, ko2 = jax.random.split(jax.random.PRNGKey(2), 2)
    odd_p = jax.random.normal(ko1, (2, 3, 5, 7), dtype=jnp.float32)
    odd_t = jax.random.normal(ko2, (2, 3, 5, 7), dtype=jnp.float32)
    out_odd = jax.block_until_ready(loss_fn(odd_p, odd_t))
    assert jnp.allclose(out_odd, jnp.mean((odd_p - odd_t) ** 2),
                        rtol=1e-5, atol=1e-5)
    out_odd_none = jax.block_until_ready(
        MSELossPallas(reduction='none')(odd_p, odd_t))
    assert jnp.allclose(out_odd_none, (odd_p - odd_t) ** 2, rtol=1e-6, atol=1e-6)

    print("KERNEL_OK")
</pallas_src>

<mosaic_0001>
module attributes {stable_mosaic.version = 11 : i64} {
  func.func @_mse_sum_kernel(%arg0: i32, %arg1: i32, %arg2: memref<16x128xf32, #tpu.memory_space<vmem>>, %arg3: memref<16x128xf32, #tpu.memory_space<vmem>>, %arg4: memref<1x128xf32, #tpu.memory_space<vmem>>, %arg5: memref<1x128xf32, #tpu.memory_space<vmem>>) attributes {dimension_semantics = [#tpu.dimension_semantics<parallel>, #tpu.dimension_semantics<arbitrary>], iteration_bounds = array<i64: 1, 1>, scalar_prefetch = 0 : i64, scratch_operands = 1 : i64, tpu.core_type = #tpu.core_type<tc>, window_params = [{transform_indices = @transform_0, window_bounds = array<i64: 16, 128>}, {transform_indices = @transform_1, window_bounds = array<i64: 16, 128>}, {transform_indices = @transform_2, window_bounds = array<i64: 1, 128>}]} {
    %c0_i32 = arith.constant 0 : i32
    %0 = arith.cmpi eq, %arg1, %c0_i32 : i32
    %1 = arith.extui %0 : i1 to i32
    %c0_i32_0 = arith.constant 0 : i32
    %2 = arith.cmpi ne, %1, %c0_i32_0 : i32
    scf.if %2 {
      %cst_10 = arith.constant 0.000000e+00 : f32
      %15 = vector.broadcast %cst_10 : f32 to vector<1x128xf32>
      %c0_11 = arith.constant 0 : index
      %c0_12 = arith.constant 0 : index
      %16 = vector.load %arg5[%c0_11, %c0_12] : memref<1x128xf32, #tpu.memory_space<vmem>>, vector<1x128xf32>
      tpu.vector_store %arg5[%c0_11, %c0_12], %15 {strides = array<i32>} : memref<1x128xf32, #tpu.memory_space<vmem>>, vector<1x128xf32>,
    } else {
    }
    %c0 = arith.constant 0 : index
    %c0_1 = arith.constant 0 : index
    %3 = vector.load %arg2[%c0, %c0_1] : memref<16x128xf32, #tpu.memory_space<vmem>>, vector<16x128xf32>
    %c0_2 = arith.constant 0 : index
    %c0_3 = arith.constant 0 : index
    %4 = vector.load %arg3[%c0_2, %c0_3] : memref<16x128xf32, #tpu.memory_space<vmem>>, vector<16x128xf32>
    %5 = arith.subf %3, %4 : vector<16x128xf32>
    %6 = arith.mulf %5, %5 : vector<16x128xf32>
    %c0_4 = arith.constant 0 : index
    %c0_5 = arith.constant 0 : index
    %7 = vector.load %arg5[%c0_4, %c0_5] : memref<1x128xf32, #tpu.memory_space<vmem>>, vector<1x128xf32>
    %cst = arith.constant dense<0.000000e+00> : vector<128xf32>
    %8 = vector.multi_reduction <add>, %6, %cst [0] : vector<16x128xf32> to vector<128xf32>
    %9 = vector.shape_cast %8 : vector<128xf32> to vector<1x128xf32>
    %10 = arith.addf %7, %9 : vector<1x128xf32>
    %c0_6 = arith.constant 0 : index
    %c0_7 = arith.constant 0 : index
    %11 = vector.load %arg5[%c0_6, %c0_7] : memref<1x128xf32, #tpu.memory_space<vmem>>, vector<1x128xf32>
    tpu.vector_store %arg5[%c0_6, %c0_7], %10 {strides = array<i32>} : memref<1x128xf32, #tpu.memory_space<vmem>>, vector<1x128xf32>,
    %c0_i32_8 = arith.constant 0 : i32
    %12 = arith.cmpi eq, %arg1, %c0_i32_8 : i32
    %13 = arith.extui %12 : i1 to i32
    %c0_i32_9 = arith.constant 0 : i32
    %14 = arith.cmpi ne, %13, %c0_i32_9 : i32
    scf.if %14 {
      %c0_10 = arith.constant 0 : index
      %c0_11 = arith.constant 0 : index
      %15 = vector.load %arg5[%c0_10, %c0_11] : memref<1x128xf32, #tpu.memory_space<vmem>>, vector<1x128xf32>
      %c0_12 = arith.constant 0 : index
      %c0_13 = arith.constant 0 : index
      %16 = vector.load %arg4[%c0_12, %c0_13] : memref<1x128xf32, #tpu.memory_space<vmem>>, vector<1x128xf32>
      tpu.vector_store %arg4[%c0_12, %c0_13], %15 {strides = array<i32>} : memref<1x128xf32, #tpu.memory_space<vmem>>, vector<1x128xf32>,
    } else {
    }
    return
  }
  func.func @transform_0(%arg0: i32, %arg1: i32) -> (i32, i32) {
    %c1_i32 = arith.constant 1 : i32
    %0 = arith.muli %arg0, %c1_i32 : i32
    %1 = arith.addi %0, %arg1 : i32
    %c0_i32 = arith.constant 0 : i32
    %c0_i32_0 = arith.constant 0 : i32
    return %1, %c0_i32 : i32, i32
  }
  func.func @transform_1(%arg0: i32, %arg1: i32) -> (i32, i32) {
    %c1_i32 = arith.constant 1 : i32
    %0 = arith.muli %arg0, %c1_i32 : i32
    %1 = arith.addi %0, %arg1 : i32
    %c0_i32 = arith.constant 0 : i32
    %c0_i32_0 = arith.constant 0 : i32
    return %1, %c0_i32 : i32, i32
  }
  func.func @transform_2(%arg0: i32, %arg1: i32) -> (i32, i32) {
    %c0_i32 = arith.constant 0 : i32
    %c0_i32_0 = arith.constant 0 : i32
    return %c0_i32, %arg0 : i32, i32
  }
}

</mosaic_0001>

<llo_original>
// kernel: tpu_custom_call.1
$region0: #{tpu_custom_call.1}
  #allocation0 [shape = 'u32[]', space=smem, size = 0x4, offset = 0x4, fixed_abs, tag = 'smem constant byte address 0x4 - core index']
  #allocation1 [shape = 'u32[144,128]{1,0:T(1,128)}', space=vmem, size = 0x12000, scoped, tag = 'internal scratch']
  #allocation2 [shape = 'f32[1,128]{1,0:T(1,128)}', space=vmem, size = 0x200, scoped, tag = 'scratch operand']
  %s0 = inlined_call_operand.hbm [shape: f32[16,128], index: 0, kind: input, shape index: {}]
  %s1 = inlined_call_operand.hbm [shape: f32[16,128], index: 1, kind: input, shape index: {}]
  %s2 = inlined_call_operand.hbm [shape: f32[1,128], index: 2, kind: output, shape index: {}]
  %s3 = sld [smem:[#allocation0]]
  $region34: #{tpu_custom_call.1} parent=0
    _
  %s5 = ssub.s32 1, %s3
  %s6 = scalar_select 0, %s5, %s3
  $region1: #{tpu_custom_call.1} parent=0
    #allocation3 [shape = 'u8[8192]{0}', space=vmem, size = 0x2000, scoped, tag = 'input window, operand 0, single buffered']
    #allocation4 [shape = 's32[1]{0}', space=sflag, size = 0x4, scoped, tag = 'scoped memory for tpu_custom_call.1']
    #allocation5 [shape = 's32[1]{0}', space=sflag, size = 0x4, scoped, tag = 'scoped memory for tpu_custom_call.1']
    #allocation6 [shape = 'u8[8192]{0}', space=vmem, size = 0x2000, scoped, tag = 'input window, operand 1, single buffered']
    #allocation7 [shape = 's32[1]{0}', space=sflag, size = 0x4, scoped, tag = 'scoped memory for tpu_custom_call.1']
    #allocation8 [shape = 'u8[512]{0}', space=vmem, size = 0x400, scoped, tag = 'output window, operand 0, single buffered']
    %7 = vsyncpa [#allocation4], 0
    %8 = vsyncpa [#allocation7], 0
    %9 = vsyncpa [#allocation5], 0
    // Predicated region
    $region2: #{tpu_custom_call.1} parent=1 // pred_check
      _
    $region3: #{tpu_custom_call.1} parent=1 // pred_check_branch
      %11 = sbr.rel (0) target = $region5
    $region4: #{tpu_custom_call.1} parent=1 // pred_region
      %s12 = sadd.s32 0, 0
      %s13 = smul.u32 2, %s12
      %s15 = ssub.s32 256, 256
      %16 = vsyncadd [#allocation4], %s15
      %s17 = smul.addr %s13, 128
      %s18 = scalar_lea.hbm %s0, %s17
      %s19 = sshll.u32 [#allocation3], 4
      %s20 = int_to_ptr.vmem [resolvable:$true] %s19
      %25 = dma.hbm_to_vmem [thread:$0]  %s18, 256, %s20, [#allocation4], 128, 128, 8
    $region5: #{tpu_custom_call.1} parent=1 // pred_fallthru
      _
    // Predicated region
    $region6: #{tpu_custom_call.1} parent=1 // pred_check
      _
    $region7: #{tpu_custom_call.1} parent=1 // pred_check_branch
      %27 = sbr.rel (0) target = $region9
    $region8: #{tpu_custom_call.1} parent=1 // pred_region
      %s28 = sadd.s32 0, 0
      %s29 = smul.u32 2, %s28
      %s31 = ssub.s32 256, 256
      %32 = vsyncadd [#allocation7], %s31
      %s33 = smul.addr %s29, 128
      %s34 = scalar_lea.hbm %s1, %s33
      %s35 = sshll.u32 [#allocation6], 4
      %s36 = int_to_ptr.vmem [resolvable:$true] %s35
      %41 = dma.hbm_to_vmem [thread:$0]  %s34, 256, %s36, [#allocation7], 128, 128, 8
    $region9: #{tpu_custom_call.1} parent=1 // pred_fallthru
      _
    // Predicated region
    $region10: #{tpu_custom_call.1} parent=1 // pred_check
      _
    $region11: #{tpu_custom_call.1} parent=1 // pred_check_branch
      %43 = sbr.rel (0) target = $region13
    $region12: #{tpu_custom_call.1} parent=1 // pred_region
      %44 = dma.done [#allocation4], 256
    $region13: #{tpu_custom_call.1} parent=1 // pred_fallthru
      _
    // Predicated region
    $region14: #{tpu_custom_call.1} parent=1 // pred_check
      _
    $region15: #{tpu_custom_call.1} parent=1 // pred_check_branch
      %46 = sbr.rel (0) target = $region17
    $region16: #{tpu_custom_call.1} parent=1 // pred_region
      %47 = dma.done [#allocation7], 256
    $region17: #{tpu_custom_call.1} parent=1 // pred_fallthru
      _
    %s48 = sadd.s32 0, 0
    %s49 = smul.u32 2, %s48
    %s50 = sadd.s32 0, 0
    %s51 = smul.u32 2, %s50
    %p52 = scmp.eq.s32.totalorder 0, 0
    // Predicated region
    $region18: #{tpu_custom_call.1} parent=1 // pred_check
      %p53 = pneg %p52
    $region19: #{tpu_custom_call.1} parent=1 // pred_check_branch
      %55 = sbr.rel (%p53) target = $region21
    $region20: #{tpu_custom_call.1} parent=1 // pred_region
      %56 = vst [vmem:[#allocation2] sm:$0x1] 0.0
    $region21: #{tpu_custom_call.1} parent=1 // pred_fallthru
      _
    %v57 = vld [vmem:[#allocation3] sm:$0xff]
    %v58 = vld [vmem:[#allocation3 + $0x8] sm:$0xff]
    %v59 = vld [vmem:[#allocation6] sm:$0xff]
    %v60 = vld [vmem:[#allocation6 + $0x8] sm:$0xff]
    %v61 = vsub.f32 %v57, %v59
    %v62 = vsub.f32 %v58, %v60
    %v63 = vmul.f32 %v61, %v61
    %v64 = vmul.f32 %v62, %v62
    %v65 = vld [vmem:[#allocation2] sm:$0x1]
    %v66 = vadd.f32 %v63, %v64
    %v67 = vrot.slane %v66, 4
    %v68 = vadd.f32 %v66, %v67
    %v69 = vrot.slane %v68, 2
    %v70 = vadd.f32 %v68, %v69
    %v71 = vrot.slane %v70, 1
    %v72 = vadd.f32 %v70, %v71
    %v73 = vadd.f32 %v65, %v72
    %74 = vst [vmem:[#allocation2] sm:$0x1] %v73
    // Predicated region
    $region22: #{tpu_custom_call.1} parent=1 // pred_check
      %p75 = pneg %p52
    $region23: #{tpu_custom_call.1} parent=1 // pred_check_branch
      %77 = sbr.rel (%p75) target = $region25
    $region24: #{tpu_custom_call.1} parent=1 // pred_region
      %v78 = vld [vmem:[#allocation2] sm:$0x1]
      %79 = vst [vmem:[#allocation8] sm:$0x1] %v78
    $region25: #{tpu_custom_call.1} parent=1 // pred_fallthru
      _
    // Predicated region
    $region26: #{tpu_custom_call.1} parent=1 // pred_check
      _
    $region27: #{tpu_custom_call.1} parent=1 // pred_check_branch
      %81 = sbr.rel (0) target = $region29
    $region28: #{tpu_custom_call.1} parent=1 // pred_region
      %s83 = ssub.s32 16, 16
      %84 = vsyncadd [#allocation5], %s83
      %s86 = sshll.u32 [#allocation8], 4
      %s87 = int_to_ptr.vmem [resolvable:$true] %s86
      %89 = dma.vmem_to_hbm [thread:$0]  %s87, 16, %s2, [#allocation5]
    $region29: #{tpu_custom_call.1} parent=1 // pred_fallthru
      _
    // Predicated region
    $region30: #{tpu_custom_call.1} parent=1 // pred_check
      _
    $region31: #{tpu_custom_call.1} parent=1 // pred_check_branch
      %91 = sbr.rel (0) target = $region33
    $region32: #{tpu_custom_call.1} parent=1 // pred_region
      %92 = dma.done [#allocation5], 16
    $region33: #{tpu_custom_call.1} parent=1 // pred_fallthru
      _
    %93 = vsyncpa [#allocation4], 1
    %94 = vsyncpa [#allocation7], 1
    %95 = vsyncpa [#allocation5], 1

</llo_original>
